<compile_context>
chip_gen: v7x
topology: tpu7x:2x2x1
jax: 0.10.0
libtpu: 0.0.40
codegen_flags: <defaults>
</compile_context>

<pallas_src>
import numpy as np
import jax
import jax.numpy as jnp
from jax.experimental import pallas as pl
from jax.experimental.pallas import tpu as pltpu


_VMEM_LIMIT = 64 * 1024 * 1024  # <= physical VMEM on v5e/v6e/v7x


# ----------------------------------------------------------------------------- #
# small helpers
# ----------------------------------------------------------------------------- #
def _round_up(x, m):
    return ((x + m - 1) // m) * m


def _choose_tile_h(new_h, wp):
    # Target ~256K f32 elements per channel plane (~1 MiB) per tile so the HBM-bound
    # elementwise kernels run near roofline; keep TH a multiple of 32 and avoid
    # excessive zero-row padding (Hp = round_up(new_h, TH)).
    target = max(32, min(512, ((256 * 1024 // max(wp, 1)) // 32) * 32))
    h32 = _round_up(new_h, 32)
    best = 32
    for th in range(32, min(target, h32) + 1, 32):
        if _round_up(new_h, th) - new_h <= max(32, new_h // 8):
            best = th
    return best


def _choose_tile_s(s):
    # output tile along the resized axis; keep it a multiple of 128 (lane-dense)
    # or the full extent for small sizes.
    for cand in (256, 128):
        if s % cand == 0:
            return cand
    return s


# ----------------------------------------------------------------------------- #
# in-kernel color math (faithful port of torchvision functional_tensor)
# ----------------------------------------------------------------------------- #
def _rgb_to_gray(x):
    # torchvision rgb_to_grayscale weights
    return 0.2989 * x[0] + 0.5870 * x[1] + 0.1140 * x[2]


def _blend(img, other, ratio):
    # torchvision _blend for float images (bound = 1.0)
    return jnp.clip(ratio * img + (1.0 - ratio) * other, 0.0, 1.0)


def _adjust_hue(x, hue_factor):
    # x: (3, H, W) float32 in [0, 1]
    r, g, b = x[0], x[1], x[2]
    maxc = jnp.maximum(jnp.maximum(r, g), b)
    minc = jnp.minimum(jnp.minimum(r, g), b)
    eqc = maxc == minc
    cr = maxc - minc
    ones = jnp.ones_like(maxc)
    inv_max = pl.reciprocal(jnp.where(eqc, ones, maxc), approx=True)   # EUP
    s = cr * inv_max
    inv_cr = pl.reciprocal(jnp.where(eqc, ones, cr), approx=True)      # EUP
    rc = (maxc - r) * inv_cr
    gc = (maxc - g) * inv_cr
    bc = (maxc - b) * inv_cr
    hr = jnp.where(maxc == r, bc - gc, 0.0)
    hg = jnp.where((maxc == g) & (maxc != r), 2.0 + rc - bc, 0.0)
    hb = jnp.where((maxc != g) & (maxc != r), 4.0 + gc - rc, 0.0)
    h = jnp.mod((hr + hg + hb) * (1.0 / 6.0) + 1.0, 1.0)

    # hue shift
    h = jnp.mod(h + hue_factor, 1.0)
    v = maxc

    # hsv -> rgb (no int path: float floor + clamp + float compares)
    h6 = h * 6.0
    i_f = jnp.minimum(jnp.floor(h6), 5.0)
    f = h6 - i_f
    p = jnp.clip(v * (1.0 - s), 0.0, 1.0)
    q = jnp.clip(v * (1.0 - s * f), 0.0, 1.0)
    t = jnp.clip(v * (1.0 - s * (1.0 - f)), 0.0, 1.0)

    def sel(c0, c1, c2, c3, c4, c5):
        return jnp.where(i_f < 0.5, c0,
               jnp.where(i_f < 1.5, c1,
               jnp.where(i_f < 2.5, c2,
               jnp.where(i_f < 3.5, c3,
               jnp.where(i_f < 4.5, c4, c5)))))

    r2 = sel(v, q, p, p, t, v)
    g2 = sel(t, v, v, q, p, p)
    b2 = sel(p, p, t, v, v, q)
    return jnp.stack([r2, g2, b2], axis=0)


def _pre_contrast_ops(x, apply_b, bf, apply_s, sf, apply_h, hf):
    # ToTensor already applied; runs the distort ops that precede a contrast op.
    if apply_b:
        x = _blend(x, 0.0, bf)
    if apply_s:
        x = _blend(x, _rgb_to_gray(x)[None], sf)
    if apply_h:
        x = _adjust_hue(x, hf)
    return x


# ----------------------------------------------------------------------------- #
# Pallas kernel 1a: grayscale-sum pre-pass (contrast fires and duplication is cheap)
#   grid-carried (1,1) sum accumulator; padded rows/cols stay black -> contribute 0.
# ----------------------------------------------------------------------------- #
def make_graysum_kernel(apply_b, bf, apply_s, sf, apply_h, hf):
    def kernel(img_ref, sum_ref):
        @pl.when(pl.program_id(0) == 0)
        def _init():
            sum_ref[...] = jnp.zeros_like(sum_ref)

        x = img_ref[...].astype(jnp.float32) * (1.0 / 255.0)   # ToTensor
        x = _pre_contrast_ops(x, apply_b, bf, apply_s, sf, apply_h, hf)
        sum_ref[...] = sum_ref[...] + jnp.sum(_rgb_to_gray(x))
    return kernel


def pallas_gray_sum(img_u8, gflags, tile_h):
    C, Hp, Wp = img_u8.shape
    kern = make_graysum_kernel(*gflags)
    return pl.pallas_call(
        kern,
        out_shape=jax.ShapeDtypeStruct((1, 1), jnp.float32),
        grid=(Hp // tile_h,),
        in_specs=[pl.BlockSpec((C, tile_h, Wp), lambda i: (0, i, 0))],
        out_specs=pl.BlockSpec((1, 1), lambda i: (0, 0)),
        compiler_params=pltpu.CompilerParams(
            dimension_semantics=("arbitrary",),
            vmem_limit_bytes=_VMEM_LIMIT),
    )(img_u8)


# ----------------------------------------------------------------------------- #
# Pallas kernel 1b: grayscale-sum pre-pass that ALSO emits the post-hue bf16 image.
#   Used when contrast fires after saturation/hue so the expensive hue math runs once.
# ----------------------------------------------------------------------------- #
def make_graysum_emit_kernel(apply_b, bf, apply_s, sf, apply_h, hf):
    def kernel(img_ref, sum_ref, out_ref):
        @pl.when(pl.program_id(0) == 0)
        def _init():
            sum_ref[...] = jnp.zeros_like(sum_ref)

        x = img_ref[...].astype(jnp.float32) * (1.0 / 255.0)   # ToTensor
        x = _pre_contrast_ops(x, apply_b, bf, apply_s, sf, apply_h, hf)
        sum_ref[...] = sum_ref[...] + jnp.sum(_rgb_to_gray(x))
        out_ref[...] = x.astype(out_ref.dtype)
    return kernel


def pallas_gray_sum_emit(img_u8, gflags, tile_h):
    C, Hp, Wp = img_u8.shape
    kern = make_graysum_emit_kernel(*gflags)
    return pl.pallas_call(
        kern,
        out_shape=(jax.ShapeDtypeStruct((1, 1), jnp.float32),
                   jax.ShapeDtypeStruct((C, Hp, Wp), jnp.bfloat16)),
        grid=(Hp // tile_h,),
        in_specs=[pl.BlockSpec((C, tile_h, Wp), lambda i: (0, i, 0))],
        out_specs=(pl.BlockSpec((1, 1), lambda i: (0, 0)),
                   pl.BlockSpec((C, tile_h, Wp), lambda i: (0, i, 0))),
        compiler_params=pltpu.CompilerParams(
            dimension_semantics=("arbitrary",),
            vmem_limit_bytes=_VMEM_LIMIT),
    )(img_u8)


# ----------------------------------------------------------------------------- #
# Pallas kernel 2a: fused ToTensor + full RandomPhotometricDistort + channel perm
#   uint8 tile in -> bf16 tile out, H-tiled, lane-dense (Wp % 128 == 0)
# ----------------------------------------------------------------------------- #
def make_photometric_kernel(perm, apply_b, bf, apply_c1, cf1,
                            apply_s, sf, apply_h, hf, apply_c2, cf2):
    def kernel(mean_ref, img_ref, out_ref):
        x = img_ref[...].astype(jnp.float32) * (1.0 / 255.0)   # ToTensor
        if apply_b:                                            # adjust_brightness
            x = _blend(x, 0.0, bf)
        if apply_c1:                                           # adjust_contrast (before)
            x = _blend(x, mean_ref[0, 0], cf1)
        if apply_s:                                            # adjust_saturation
            x = _blend(x, _rgb_to_gray(x)[None], sf)
        if apply_h:                                            # adjust_hue
            x = _adjust_hue(x, hf)
        if apply_c2:                                           # adjust_contrast (after)
            x = _blend(x, mean_ref[0, 0], cf2)
        # channel permutation fused: static reorder of which plane lands where
        for dst in range(3):
            out_ref[dst] = x[perm[dst]].astype(out_ref.dtype)
    return kernel


def pallas_photometric(img_u8, mean_arr, perm, flags, tile_h):
    C, Hp, Wp = img_u8.shape
    kern = make_photometric_kernel(perm, *flags)
    return pl.pallas_call(
        kern,
        out_shape=jax.ShapeDtypeStruct((C, Hp, Wp), jnp.bfloat16),
        grid=(Hp // tile_h,),
        in_specs=[
            pl.BlockSpec(memory_space=pltpu.MemorySpace.SMEM),        # (1,1) gray mean
            pl.BlockSpec((C, tile_h, Wp), lambda i: (0, i, 0)),       # uint8 tile
        ],
        out_specs=pl.BlockSpec((C, tile_h, Wp), lambda i: (0, i, 0)),
        compiler_params=pltpu.CompilerParams(
            dimension_semantics=("parallel",),
            vmem_limit_bytes=_VMEM_LIMIT),
    )(mean_arr, img_u8)


# ----------------------------------------------------------------------------- #
# Pallas kernel 2b: contrast-after + channel permutation on the bf16 intermediate
#   (pairs with pallas_gray_sum_emit; avoids recomputing hue/saturation)
# ----------------------------------------------------------------------------- #
def make_contrast_perm_kernel(perm, cf):
    def kernel(mean_ref, img_ref, out_ref):
        x = img_ref[...].astype(jnp.float32)
        x = _blend(x, mean_ref[0, 0], cf)
        for dst in range(3):
            out_ref[dst] = x[perm[dst]].astype(out_ref.dtype)
    return kernel


def pallas_contrast_perm(img_bf16, mean_arr, perm, cf, tile_h):
    C, Hp, Wp = img_bf16.shape
    kern = make_contrast_perm_kernel(perm, cf)
    return pl.pallas_call(
        kern,
        out_shape=jax.ShapeDtypeStruct((C, Hp, Wp), jnp.bfloat16),
        grid=(Hp // tile_h,),
        in_specs=[
            pl.BlockSpec(memory_space=pltpu.MemorySpace.SMEM),
            pl.BlockSpec((C, tile_h, Wp), lambda i: (0, i, 0)),
        ],
        out_specs=pl.BlockSpec((C, tile_h, Wp), lambda i: (0, i, 0)),
        compiler_params=pltpu.CompilerParams(
            dimension_semantics=("parallel",),
            vmem_limit_bytes=_VMEM_LIMIT),
    )(mean_arr, img_bf16)


# ----------------------------------------------------------------------------- #
# Pallas kernel 3: bilinear resize (+ fused hflip) as two bf16 MXU matmuls.
#   Matmul order picked per image: contract the LARGER padded axis first.
#   Both grid axes "parallel" (megacore / v7x dual-TC friendly), f32 accumulate.
# ----------------------------------------------------------------------------- #
def _resize_kernel_hfirst(wh_ref, img_ref, wwt_ref, out_ref):
    # wh: (ts, Hp), img: (1, Hp, Wp), wwt: (Wp, S), out: (1, ts, S)
    tmp = jnp.dot(wh_ref[...], img_ref[0], preferred_element_type=jnp.float32)
    out_ref[0] = jnp.dot(tmp.astype(jnp.bfloat16), wwt_ref[...],
                         preferred_element_type=jnp.float32)


def _resize_kernel_wfirst(wh_ref, img_ref, wwt_ref, out_ref):
    # wh: (S, Hp), img: (1, Hp, Wp), wwt: (Wp, ts), out: (1, S, ts)
    tmp = jnp.dot(img_ref[0], wwt_ref[...], preferred_element_type=jnp.float32)
    out_ref[0] = jnp.dot(wh_ref[...], tmp.astype(jnp.bfloat16),
                         preferred_element_type=jnp.float32)


def pallas_resize(img_bf16, wh_bf16, wwt_bf16, size):
    # Output stays f32 to match the PyTorch pipeline's float image.
    C, Hp, Wp = img_bf16.shape
    ts = _choose_tile_s(size)
    if Wp >= Hp:
        # landscape: contract W first -> 2*S*Hp*(Wp+S) FLOPs
        kern = _resize_kernel_wfirst
        in_specs = [
            pl.BlockSpec((size, Hp), lambda c, s: (0, 0)),
            pl.BlockSpec((1, Hp, Wp), lambda c, s: (c, 0, 0)),
            pl.BlockSpec((Wp, ts), lambda c, s: (0, s)),
        ]
        out_spec = pl.BlockSpec((1, size, ts), lambda c, s: (c, 0, s))
    else:
        # portrait: contract H first -> 2*S*Wp*(Hp+S) FLOPs
        kern = _resize_kernel_hfirst
        in_specs = [
            pl.BlockSpec((ts, Hp), lambda c, s: (s, 0)),
            pl.BlockSpec((1, Hp, Wp), lambda c, s: (c, 0, 0)),
            pl.BlockSpec((Wp, size), lambda c, s: (0, 0)),
        ]
        out_spec = pl.BlockSpec((1, ts, size), lambda c, s: (c, s, 0))
    return pl.pallas_call(
        kern,
        out_shape=jax.ShapeDtypeStruct((C, size, size), jnp.float32),
        grid=(C, size // ts),
        in_specs=in_specs,
        out_specs=out_spec,
        compiler_params=pltpu.CompilerParams(
            dimension_semantics=("parallel", "parallel"),
            vmem_limit_bytes=_VMEM_LIMIT),
    )(wh_bf16, img_bf16, wwt_bf16)


def _bilinear_weight_matrix(in_size, in_padded, out_size):
    # torch bilinear interpolate, align_corners=False, no antialias;
    # columns >= in_size stay zero so padded source pixels never contribute.
    out_idx = np.arange(out_size, dtype=np.float64)
    scale = in_size / out_size
    src = (out_idx + 0.5) * scale - 0.5
    src = np.maximum(src, 0.0)
    x0 = np.minimum(np.floor(src).astype(np.int64), in_size - 1)
    x1 = np.minimum(x0 + 1, in_size - 1)
    w1 = src - x0
    w0 = 1.0 - w1
    W = np.zeros((out_size, in_padded), np.float32)
    W[np.arange(out_size), x0] += w0.astype(np.float32)
    W[np.arange(out_size), x1] += w1.astype(np.float32)
    return W


# device-resident bf16 weight caches (avoid per-call numpy build + H2D copy)
# TODO(synk): for never-repeating crop sizes, ship only the compact (x0,x1,w0,w1)
#             arrays and expand them on device instead of caching dense matrices.
_WH_CACHE = {}
_WWT_CACHE = {}


def _get_wh(in_h, hp, out_s):
    key = (in_h, hp, out_s)
    if key not in _WH_CACHE:
        _WH_CACHE[key] = jnp.asarray(_bilinear_weight_matrix(in_h, hp, out_s),
                                     dtype=jnp.bfloat16)
    return _WH_CACHE[key]


def _get_wwt(in_w, wp, out_s, flip):
    key = (in_w, wp, out_s, bool(flip))
    if key not in _WWT_CACHE:
        ww = _bilinear_weight_matrix(in_w, wp, out_s)
        if flip:
            ww = ww[::-1, :]                       # resize-then-hflip fused
        _WWT_CACHE[key] = jnp.asarray(np.ascontiguousarray(ww.T), dtype=jnp.bfloat16)
    return _WWT_CACHE[key]


# ----------------------------------------------------------------------------- #
# host-side RandomIoUCrop sampling (data-dependent rejection loop)
# TODO(synk): the RandomIoUCrop rejection-sampling loop + IoU test produces
#             data-dependent output shapes; it runs on the host (like PyTorch's
#             eager loop) while all per-pixel work stays in Pallas kernels.
# ----------------------------------------------------------------------------- #
def _box_iou_np(boxes, box):
    lt = np.maximum(boxes[:, :2], box[:2])
    rb = np.minimum(boxes[:, 2:], box[2:])
    wh = np.clip(rb - lt, 0.0, None)
    inter = wh[:, 0] * wh[:, 1]
    a1 = (boxes[:, 2] - boxes[:, 0]) * (boxes[:, 3] - boxes[:, 1])
    a2 = (box[2] - box[0]) * (box[3] - box[1])
    return inter / (a1 + a2 - inter)


def _sample_iou_crop(rng, orig_w, orig_h, boxes,
                     min_scale=0.3, max_scale=1.0,
                     min_ar=0.5, max_ar=2.0,
                     options=(0.0, 0.1, 0.3, 0.5, 0.7, 0.9, 1.0),
                     trials=40, max_rounds=100):
    n = boxes.shape[0]
    for _ in range(max_rounds):  # safety cap (original loops forever)
        idx = int(rng.randint(0, len(options)))
        min_jac = options[idx]
        if min_jac >= 1.0:
            return False, 0, 0, orig_w, orig_h, np.ones(n, bool)
        for _ in range(trials):
            r = min_scale + (max_scale - min_scale) * rng.rand(2)
            new_w = int(orig_w * r[0])
            new_h = int(orig_h * r[1])
            if new_h == 0 or new_w == 0:
                continue
            ar = new_w / new_h
            if not (min_ar <= ar <= max_ar):
                continue
            r = rng.rand(2)
            left = int((orig_w - new_w) * r[0])
            top = int((orig_h - new_h) * r[1])
            right, bottom = left + new_w, top + new_h
            if left == right or top == bottom:
                continue
            cx = 0.5 * (boxes[:, 0] + boxes[:, 2])
            cy = 0.5 * (boxes[:, 1] + boxes[:, 3])
            within = (left < cx) & (cx < right) & (top < cy) & (cy < bottom)
            if not within.any():
                continue
            sel = boxes[within]
            ious = _box_iou_np(sel, np.array([left, top, right, bottom], np.float32))
            if ious.max() < min_jac:
                continue
            return True, left, top, new_w, new_h, within
    return False, 0, 0, orig_w, orig_h, np.ones(n, bool)


# ----------------------------------------------------------------------------- #
# Base_Trans forward
# ----------------------------------------------------------------------------- #
def base_trans_forward(image_u8_hwc, target, img_size, rng):
    H, W, C = image_u8_hwc.shape
    assert C == 3, "photometric distort expects a 3-channel image"
    S = int(img_size)
    boxes_np = np.asarray(target["boxes"], np.float32)
    labels_np = np.asarray(target["labels"])

    # --- RandomIoUCrop decision (host rejection sampling) ---
    do_crop, left, top, new_w, new_h, keep = _sample_iou_crop(rng, W, H, boxes_np)

    # --- random photometric / permutation / flip decisions (host) ---
    p = 0.5
    r = rng.rand(7)
    apply_b = bool(r[0] < p)
    bf = float(rng.uniform(0.875, 1.125)) if apply_b else 1.0
    contrast_before = bool(r[1] < 0.5)
    apply_c1 = contrast_before and bool(r[2] < p)
    cf1 = float(rng.uniform(0.5, 1.5)) if apply_c1 else 1.0
    apply_s = bool(r[3] < p)
    sf = float(rng.uniform(0.5, 1.5)) if apply_s else 1.0
    apply_h = bool(r[4] < p)
    hf = float(rng.uniform(-0.05, 0.05)) if apply_h else 0.0
    apply_c2 = (not contrast_before) and bool(r[5] < p)
    cf2 = float(rng.uniform(0.5, 1.5)) if apply_c2 else 1.0
    if r[6] < p:
        perm = tuple(int(v) for v in rng.permutation(C))
    else:
        perm = (0, 1, 2)
    do_flip = bool(rng.rand() < p)

    # --- uint8 layout glue: crop + HWC->CHW + pad to tile-aligned (one cheap pass) ---
    # TODO(synk): the HWC->CHW transpose of the uint8 source stays in XLA; folding it
    #             into the kernel would force a 3-wide lane layout.
    Wp = _round_up(new_w, 128)
    TH = _choose_tile_h(new_h, Wp)
    Hp = _round_up(new_h, TH)
    img_c = jnp.transpose(image_u8_hwc[top:top + new_h, left:left + new_w, :], (2, 0, 1))
    img_u8 = jnp.pad(img_c, ((0, 0), (0, Hp - new_h), (0, Wp - new_w)))

    npix = np.float32(new_h * new_w)
    dedup_contrast_after = apply_c2 and (apply_s or apply_h)

    if dedup_contrast_after:
        # contrast fires AFTER expensive sat/hue: pre-pass computes the gray sum AND
        # emits the post-hue bf16 intermediate, so hue math runs exactly once.
        gsum, img_pre = pallas_gray_sum_emit(
            img_u8, (apply_b, bf, apply_s, sf, apply_h, hf), TH)
        mean_arr = (gsum / npix).astype(jnp.float32)
        img_bf16 = pallas_contrast_perm(img_pre, mean_arr, perm, cf2, TH)
    else:
        if apply_c1 or apply_c2:
            # ops preceding the contrast that actually fire (brightness only here)
            if apply_c1:
                gflags = (apply_b, bf, False, 1.0, False, 0.0)
            else:
                gflags = (apply_b, bf, apply_s, sf, apply_h, hf)
            gsum = pallas_gray_sum(img_u8, gflags, TH)
            mean_arr = (gsum / npix).astype(jnp.float32)
        else:
            mean_arr = jnp.zeros((1, 1), jnp.float32)
        img_bf16 = pallas_photometric(
            img_u8, mean_arr, perm,
            (apply_b, bf, apply_c1, cf1, apply_s, sf, apply_h, hf, apply_c2, cf2), TH)

    # --- bilinear resize to (S, S); hflip fused into the W weight matrix ---
    wh = _get_wh(new_h, Hp, S)                 # (S, Hp) bf16 (cached)
    wwt = _get_wwt(new_w, Wp, S, do_flip)      # (Wp, S) bf16 (cached)
    img_out = pallas_resize(img_bf16, wh, wwt, S)

    # --- bbox transform: tiny (N,4) work -> plain numpy on host ---
    boxes = boxes_np.copy()
    labels = labels_np
    if do_crop:
        boxes = boxes[keep]
        labels = labels[keep]
        boxes[:, 0::2] = np.clip(boxes[:, 0::2] - left, 0.0, new_w)
        boxes[:, 1::2] = np.clip(boxes[:, 1::2] - top, 0.0, new_h)
    boxes[:, 0::2] *= S / new_w
    boxes[:, 1::2] *= S / new_h
    if do_flip:
        x0 = boxes[:, 0].copy()
        x1 = boxes[:, 2].copy()
        boxes[:, 0] = S - x1
        boxes[:, 2] = S - x0

    out_target = dict(target)
    out_target["boxes"] = jnp.asarray(boxes)
    out_target["labels"] = jnp.asarray(labels)
    out_target["area"] = target["area"]        # original pipeline leaves these untouched
    out_target["iscrowd"] = target["iscrowd"]
    return img_out, out_target


# ----------------------------------------------------------------------------- #
if __name__ == "__main__":
    key = jax.random.PRNGKey(0)
    H, W, C = 24, 32, 3
    IMG_SIZE = 32  # small stand-in for img_size=1024

    image_u8 = jax.random.randint(key, (H, W, C), 0, 256, dtype=jnp.int32).astype(jnp.uint8)

    boxes = np.array([[2.0, 3.0, 12.0, 14.0],
                      [10.0, 5.0, 20.0, 18.0],
                      [15.0, 8.0, 30.0, 22.0],
                      [1.0, 1.0, 8.0, 9.0],
                      [20.0, 2.0, 31.0, 12.0]], np.float32)
    target = {
        "boxes": jnp.asarray(boxes),
        "labels": jnp.arange(1, 6, dtype=jnp.int32),
        "area": jnp.asarray((boxes[:, 2] - boxes[:, 0]) * (boxes[:, 3] - boxes[:, 1])),
        "iscrowd": jnp.zeros((5,), jnp.int32),
    }

    rng = np.random.RandomState(0)  # deterministic augmentation decisions
    out_img, out_target = base_trans_forward(image_u8, target, IMG_SIZE, rng)

    jax.block_until_ready(out_img)
    jax.block_until_ready(out_target["boxes"])
    assert out_img.shape == (3, IMG_SIZE, IMG_SIZE)
    assert out_img.dtype == jnp.float32
    assert out_target["boxes"].shape[1] == 4

    # --- smoke-exercise every Pallas path once (both photometric branches,
    #     both resize matmul orders), independent of the random decisions above ---
    img_chw = jnp.transpose(image_u8, (2, 0, 1))
    Hs, Ws, THs = 32, 128, 32
    img_pad = jnp.pad(img_chw, ((0, 0), (0, Hs - H), (0, Ws - W)))
    npix_s = np.float32(H * W)

    gs = pallas_gray_sum(img_pad, (True, 1.1, False, 1.0, False, 0.0), THs)
    mean = (gs / npix_s).astype(jnp.float32)
    ph = pallas_photometric(
        img_pad, mean, (1, 2, 0),
        (True, 1.1, True, 0.9, True, 1.2, True, 0.02, False, 1.0), THs)

    gs2, inter = pallas_gray_sum_emit(img_pad, (True, 1.1, True, 1.2, True, 0.02), THs)
    mean2 = (gs2 / npix_s).astype(jnp.float32)
    cp = pallas_contrast_perm(inter, mean2, (2, 0, 1), 1.3, THs)

    # W-first resize path (Wp >= Hp)
    r_w = pallas_resize(ph, _get_wh(H, Hs, IMG_SIZE), _get_wwt(W, Ws, IMG_SIZE, True),
                        IMG_SIZE)
    # H-first resize path (Hp > Wp)
    Ht = 160
    img_tall = jnp.pad(img_chw, ((0, 0), (0, Ht - H), (0, Ws - W)))
    tall_bf16 = (img_tall.astype(jnp.float32) * (1.0 / 255.0)).astype(jnp.bfloat16)
    r_h = pallas_resize(tall_bf16, _get_wh(H, Ht, IMG_SIZE),
                        _get_wwt(W, Ws, IMG_SIZE, False), IMG_SIZE)

    for t in (gs, mean, ph, gs2, mean2, inter, cp, r_w, r_h):
        jax.block_until_ready(t)
    assert r_w.shape == (3, IMG_SIZE, IMG_SIZE)
    assert r_h.shape == (3, IMG_SIZE, IMG_SIZE)

    print("KERNEL_OK")
</pallas_src>

<mosaic_0001>
module attributes {stable_mosaic.version = 11 : i64} {
  func.func @kernel(%arg0: i32, %arg1: memref<1x1xf32, #tpu.memory_space<smem>>, %arg2: memref<3x32x128xi8, #tpu.memory_space<vmem>>, %arg3: memref<3x32x128xbf16, #tpu.memory_space<vmem>>) attributes {dimension_semantics = [#tpu.dimension_semantics<parallel>], iteration_bounds = array<i64: 1>, scalar_prefetch = 0 : i64, scratch_operands = 0 : i64, tpu.core_type = #tpu.core_type<tc>, window_params = [{transform_indices = @transform_0, window_bounds = array<i64: 1, 1>}, {transform_indices = @transform_1, window_bounds = array<i64: 3, 32, 128>}, {transform_indices = @transform_2, window_bounds = array<i64: 3, 32, 128>}]} {
    %c0 = arith.constant 0 : index
    %c0_0 = arith.constant 0 : index
    %c0_1 = arith.constant 0 : index
    %0 = vector.load %arg2[%c0, %c0_0, %c0_1] : memref<3x32x128xi8, #tpu.memory_space<vmem>>, vector<3x32x128xi8>
    %1 = arith.uitofp %0 : vector<3x32x128xi8> to vector<3x32x128xf32>
    %cst = arith.constant 0.00392156886 : f32
    %2 = vector.broadcast %cst : f32 to vector<3x32x128xf32>
    %3 = arith.mulf %1, %2 : vector<3x32x128xf32>
    %4 = vector.extract_strided_slice %3 {offsets = [0, 0, 0], sizes = [1, 32, 128], strides = [1, 1, 1]} : vector<3x32x128xf32> to vector<1x32x128xf32>
    %5 = vector.shape_cast %4 : vector<1x32x128xf32> to vector<32x128xf32>
    %cst_2 = arith.constant 2.989000e-01 : f32
    %6 = vector.broadcast %cst_2 : f32 to vector<32x128xf32>
    %7 = arith.mulf %6, %5 : vector<32x128xf32>
    %8 = vector.extract_strided_slice %3 {offsets = [1, 0, 0], sizes = [1, 32, 128], strides = [1, 1, 1]} : vector<3x32x128xf32> to vector<1x32x128xf32>
    %9 = vector.shape_cast %8 : vector<1x32x128xf32> to vector<32x128xf32>
    %cst_3 = arith.constant 5.870000e-01 : f32
    %10 = vector.broadcast %cst_3 : f32 to vector<32x128xf32>
    %11 = arith.mulf %10, %9 : vector<32x128xf32>
    %12 = arith.addf %7, %11 : vector<32x128xf32>
    %13 = vector.extract_strided_slice %3 {offsets = [2, 0, 0], sizes = [1, 32, 128], strides = [1, 1, 1]} : vector<3x32x128xf32> to vector<1x32x128xf32>
    %14 = vector.shape_cast %13 : vector<1x32x128xf32> to vector<32x128xf32>
    %cst_4 = arith.constant 1.140000e-01 : f32
    %15 = vector.broadcast %cst_4 : f32 to vector<32x128xf32>
    %16 = arith.mulf %15, %14 : vector<32x128xf32>
    %17 = arith.addf %12, %16 : vector<32x128xf32>
    %18 = vector.shape_cast %17 : vector<32x128xf32> to vector<1x32x128xf32>
    %cst_5 = arith.constant 1.02103662 : f32
    %19 = vector.broadcast %cst_5 : f32 to vector<3x32x128xf32>
    %20 = arith.mulf %19, %3 : vector<3x32x128xf32>
    %cst_6 = arith.constant -0.0210366063 : f32
    %21 = vector.broadcast %cst_6 : f32 to vector<1x32x128xf32>
    %22 = arith.mulf %21, %18 : vector<1x32x128xf32>
    %23 = vector.broadcast %22 : vector<1x32x128xf32> to vector<3x32x128xf32>
    %24 = arith.addf %20, %23 : vector<3x32x128xf32>
    %cst_7 = arith.constant 0.000000e+00 : f32
    %cst_8 = arith.constant 1.000000e+00 : f32
    %25 = vector.broadcast %cst_7 : f32 to vector<3x32x128xf32>
    %26 = arith.maximumf %25, %24 : vector<3x32x128xf32>
    %27 = vector.broadcast %cst_8 : f32 to vector<3x32x128xf32>
    %28 = arith.minimumf %27, %26 : vector<3x32x128xf32>
    %29 = vector.extract_strided_slice %28 {offsets = [0, 0, 0], sizes = [1, 32, 128], strides = [1, 1, 1]} : vector<3x32x128xf32> to vector<1x32x128xf32>
    %30 = vector.shape_cast %29 : vector<1x32x128xf32> to vector<32x128xf32>
    %31 = vector.extract_strided_slice %28 {offsets = [1, 0, 0], sizes = [1, 32, 128], strides = [1, 1, 1]} : vector<3x32x128xf32> to vector<1x32x128xf32>
    %32 = vector.shape_cast %31 : vector<1x32x128xf32> to vector<32x128xf32>
    %33 = vector.extract_strided_slice %28 {offsets = [2, 0, 0], sizes = [1, 32, 128], strides = [1, 1, 1]} : vector<3x32x128xf32> to vector<1x32x128xf32>
    %34 = vector.shape_cast %33 : vector<1x32x128xf32> to vector<32x128xf32>
    %35 = arith.maximumf %30, %32 : vector<32x128xf32>
    %36 = arith.maximumf %35, %34 : vector<32x128xf32>
    %37 = arith.minimumf %30, %32 : vector<32x128xf32>
    %38 = arith.minimumf %37, %34 : vector<32x128xf32>
    %39 = arith.cmpf oeq, %36, %38 : vector<32x128xf32>
    %40 = arith.subf %36, %38 : vector<32x128xf32>
    %cst_9 = arith.constant 1.000000e+00 : f32
    %41 = vector.broadcast %cst_9 : f32 to vector<32x128xf32>
    %42 = arith.select %39, %41, %36 : vector<32x128xi1>, vector<32x128xf32>
    %43 = tpu.reciprocal %42 {approx = true} : vector<32x128xf32> -> vector<32x128xf32>
    %44 = arith.mulf %40, %43 : vector<32x128xf32>
    %45 = arith.select %39, %41, %40 : vector<32x128xi1>, vector<32x128xf32>
    %46 = tpu.reciprocal %45 {approx = true} : vector<32x128xf32> -> vector<32x128xf32>
    %47 = arith.subf %36, %30 : vector<32x128xf32>
    %48 = arith.mulf %47, %46 : vector<32x128xf32>
    %49 = arith.subf %36, %32 : vector<32x128xf32>
    %50 = arith.mulf %49, %46 : vector<32x128xf32>
    %51 = arith.subf %36, %34 : vector<32x128xf32>
    %52 = arith.mulf %51, %46 : vector<32x128xf32>
    %53 = arith.cmpf oeq, %36, %30 : vector<32x128xf32>
    %54 = arith.subf %52, %50 : vector<32x128xf32>
    %cst_10 = arith.constant 0.000000e+00 : f32
    %55 = vector.broadcast %cst_10 : f32 to vector<32x128xf32>
    %56 = arith.select %53, %54, %55 : vector<32x128xi1>, vector<32x128xf32>
    %57 = arith.cmpf oeq, %36, %32 : vector<32x128xf32>
    %58 = arith.cmpf one, %36, %30 : vector<32x128xf32>
    %59 = arith.andi %57, %58 : vector<32x128xi1>
    %cst_11 = arith.constant 2.000000e+00 : f32
    %60 = vector.broadcast %cst_11 : f32 to vector<32x128xf32>
    %61 = arith.addf %60, %48 : vector<32x128xf32>
    %62 = arith.subf %61, %52 : vector<32x128xf32>
    %cst_12 = arith.constant 0.000000e+00 : f32
    %63 = vector.broadcast %cst_12 : f32 to vector<32x128xf32>
    %64 = arith.select %59, %62, %63 : vector<32x128xi1>, vector<32x128xf32>
    %65 = arith.cmpf one, %36, %32 : vector<32x128xf32>
    %66 = arith.cmpf one, %36, %30 : vector<32x128xf32>
    %67 = arith.andi %65, %66 : vector<32x128xi1>
    %cst_13 = arith.constant 4.000000e+00 : f32
    %68 = vector.broadcast %cst_13 : f32 to vector<32x128xf32>
    %69 = arith.addf %68, %50 : vector<32x128xf32>
    %70 = arith.subf %69, %48 : vector<32x128xf32>
    %cst_14 = arith.constant 0.000000e+00 : f32
    %71 = vector.broadcast %cst_14 : f32 to vector<32x128xf32>
    %72 = arith.select %67, %70, %71 : vector<32x128xi1>, vector<32x128xf32>
    %73 = arith.addf %56, %64 : vector<32x128xf32>
    %74 = arith.addf %73, %72 : vector<32x128xf32>
    %cst_15 = arith.constant 0.166666672 : f32
    %75 = vector.broadcast %cst_15 : f32 to vector<32x128xf32>
    %76 = arith.mulf %74, %75 : vector<32x128xf32>
    %cst_16 = arith.constant 1.000000e+00 : f32
    %77 = vector.broadcast %cst_16 : f32 to vector<32x128xf32>
    %78 = arith.addf %76, %77 : vector<32x128xf32>
    %cst_17 = arith.constant 1.000000e+00 : f32
    %79 = vector.broadcast %cst_17 : f32 to vector<32x128xf32>
    %80 = arith.remf %78, %79 : vector<32x128xf32>
    %cst_18 = arith.constant 0.000000e+00 : f32
    %81 = vector.broadcast %cst_18 : f32 to vector<32x128xf32>
    %82 = arith.cmpf one, %80, %81 : vector<32x128xf32>
    %cst_19 = arith.constant 0.000000e+00 : f32
    %83 = vector.broadcast %cst_19 : f32 to vector<32x128xf32>
    %84 = arith.cmpf olt, %80, %83 : vector<32x128xf32>
    %cst_20 = arith.constant 0.000000e+00 : f32
    %85 = arith.cmpf olt, %cst_17, %cst_20 : f32
    %86 = vector.broadcast %85 : i1 to vector<32x128xi1>
    %87 = vector.broadcast %86 : vector<32x128xi1> to vector<32x128xi1>
    %88 = arith.xori %84, %87 : vector<32x128xi1>
    %89 = arith.andi %88, %82 : vector<32x128xi1>
    %90 = vector.broadcast %cst_17 : f32 to vector<32x128xf32>
    %91 = arith.addf %80, %90 : vector<32x128xf32>
    %92 = arith.select %89, %91, %80 : vector<32x128xi1>, vector<32x128xf32>
    %cst_21 = arith.constant -0.0445662029 : f32
    %93 = vector.broadcast %cst_21 : f32 to vector<32x128xf32>
    %94 = arith.addf %92, %93 : vector<32x128xf32>
    %cst_22 = arith.constant 1.000000e+00 : f32
    %95 = vector.broadcast %cst_22 : f32 to vector<32x128xf32>
    %96 = arith.remf %94, %95 : vector<32x128xf32>
    %cst_23 = arith.constant 0.000000e+00 : f32
    %97 = vector.broadcast %cst_23 : f32 to vector<32x128xf32>
    %98 = arith.cmpf one, %96, %97 : vector<32x128xf32>
    %cst_24 = arith.constant 0.000000e+00 : f32
    %99 = vector.broadcast %cst_24 : f32 to vector<32x128xf32>
    %100 = arith.cmpf olt, %96, %99 : vector<32x128xf32>
    %cst_25 = arith.constant 0.000000e+00 : f32
    %101 = arith.cmpf olt, %cst_22, %cst_25 : f32
    %102 = vector.broadcast %101 : i1 to vector<32x128xi1>
    %103 = vector.broadcast %102 : vector<32x128xi1> to vector<32x128xi1>
    %104 = arith.xori %100, %103 : vector<32x128xi1>
    %105 = arith.andi %104, %98 : vector<32x128xi1>
    %106 = vector.broadcast %cst_22 : f32 to vector<32x128xf32>
    %107 = arith.addf %96, %106 : vector<32x128xf32>
    %108 = arith.select %105, %107, %96 : vector<32x128xi1>, vector<32x128xf32>
    %cst_26 = arith.constant 6.000000e+00 : f32
    %109 = vector.broadcast %cst_26 : f32 to vector<32x128xf32>
    %110 = arith.mulf %108, %109 : vector<32x128xf32>
    %111 = math.floor %110 : vector<32x128xf32>
    %cst_27 = arith.constant 5.000000e+00 : f32
    %112 = vector.broadcast %cst_27 : f32 to vector<32x128xf32>
    %113 = arith.minimumf %111, %112 : vector<32x128xf32>
    %114 = arith.subf %110, %113 : vector<32x128xf32>
    %cst_28 = arith.constant 1.000000e+00 : f32
    %115 = vector.broadcast %cst_28 : f32 to vector<32x128xf32>
    %116 = arith.subf %115, %44 : vector<32x128xf32>
    %117 = arith.mulf %36, %116 : vector<32x128xf32>
    %cst_29 = arith.constant 0.000000e+00 : f32
    %cst_30 = arith.constant 1.000000e+00 : f32
    %118 = vector.broadcast %cst_29 : f32 to vector<32x128xf32>
    %119 = arith.maximumf %118, %117 : vector<32x128xf32>
    %120 = vector.broadcast %cst_30 : f32 to vector<32x128xf32>
    %121 = arith.minimumf %120, %119 : vector<32x128xf32>
    %122 = arith.mulf %44, %114 : vector<32x128xf32>
    %cst_31 = arith.constant 1.000000e+00 : f32
    %123 = vector.broadcast %cst_31 : f32 to vector<32x128xf32>
    %124 = arith.subf %123, %122 : vector<32x128xf32>
    %125 = arith.mulf %36, %124 : vector<32x128xf32>
    %cst_32 = arith.constant 0.000000e+00 : f32
    %cst_33 = arith.constant 1.000000e+00 : f32
    %126 = vector.broadcast %cst_32 : f32 to vector<32x128xf32>
    %127 = arith.maximumf %126, %125 : vector<32x128xf32>
    %128 = vector.broadcast %cst_33 : f32 to vector<32x128xf32>
    %129 = arith.minimumf %128, %127 : vector<32x128xf32>
    %cst_34 = arith.constant 1.000000e+00 : f32
    %130 = vector.broadcast %cst_34 : f32 to vector<32x128xf32>
    %131 = arith.subf %130, %114 : vector<32x128xf32>
    %132 = arith.mulf %44, %131 : vector<32x128xf32>
    %cst_35 = arith.constant 1.000000e+00 : f32
    %133 = vector.broadcast %cst_35 : f32 to vector<32x128xf32>
    %134 = arith.subf %133, %132 : vector<32x128xf32>
    %135 = arith.mulf %36, %134 : vector<32x128xf32>
    %cst_36 = arith.constant 0.000000e+00 : f32
    %cst_37 = arith.constant 1.000000e+00 : f32
    %136 = vector.broadcast %cst_36 : f32 to vector<32x128xf32>
    %137 = arith.maximumf %136, %135 : vector<32x128xf32>
    %138 = vector.broadcast %cst_37 : f32 to vector<32x128xf32>
    %139 = arith.minimumf %138, %137 : vector<32x128xf32>
    %cst_38 = arith.constant 5.000000e-01 : f32
    %140 = vector.broadcast %cst_38 : f32 to vector<32x128xf32>
    %141 = arith.cmpf olt, %113, %140 : vector<32x128xf32>
    %cst_39 = arith.constant 1.500000e+00 : f32
    %142 = vector.broadcast %cst_39 : f32 to vector<32x128xf32>
    %143 = arith.cmpf olt, %113, %142 : vector<32x128xf32>
    %cst_40 = arith.constant 2.500000e+00 : f32
    %144 = vector.broadcast %cst_40 : f32 to vector<32x128xf32>
    %145 = arith.cmpf olt, %113, %144 : vector<32x128xf32>
    %cst_41 = arith.constant 3.500000e+00 : f32
    %146 = vector.broadcast %cst_41 : f32 to vector<32x128xf32>
    %147 = arith.cmpf olt, %113, %146 : vector<32x128xf32>
    %cst_42 = arith.constant 4.500000e+00 : f32
    %148 = vector.broadcast %cst_42 : f32 to vector<32x128xf32>
    %149 = arith.cmpf olt, %113, %148 : vector<32x128xf32>
    %150 = arith.select %149, %139, %36 : vector<32x128xi1>, vector<32x128xf32>
    %151 = arith.select %147, %121, %150 : vector<32x128xi1>, vector<32x128xf32>
    %152 = arith.select %145, %121, %151 : vector<32x128xi1>, vector<32x128xf32>
    %153 = arith.select %143, %129, %152 : vector<32x128xi1>, vector<32x128xf32>
    %154 = arith.select %141, %36, %153 : vector<32x128xi1>, vector<32x128xf32>
    %cst_43 = arith.constant 5.000000e-01 : f32
    %155 = vector.broadcast %cst_43 : f32 to vector<32x128xf32>
    %156 = arith.cmpf olt, %113, %155 : vector<32x128xf32>
    %cst_44 = arith.constant 1.500000e+00 : f32
    %157 = vector.broadcast %cst_44 : f32 to vector<32x128xf32>
    %158 = arith.cmpf olt, %113, %157 : vector<32x128xf32>
    %cst_45 = arith.constant 2.500000e+00 : f32
    %159 = vector.broadcast %cst_45 : f32 to vector<32x128xf32>
    %160 = arith.cmpf olt, %113, %159 : vector<32x128xf32>
    %cst_46 = arith.constant 3.500000e+00 : f32
    %161 = vector.broadcast %cst_46 : f32 to vector<32x128xf32>
    %162 = arith.cmpf olt, %113, %161 : vector<32x128xf32>
    %cst_47 = arith.constant 4.500000e+00 : f32
    %163 = vector.broadcast %cst_47 : f32 to vector<32x128xf32>
    %164 = arith.cmpf olt, %113, %163 : vector<32x128xf32>
    %165 = arith.select %164, %121, %121 : vector<32x128xi1>, vector<32x128xf32>
    %166 = arith.select %162, %129, %165 : vector<32x128xi1>, vector<32x128xf32>
    %167 = arith.select %160, %36, %166 : vector<32x128xi1>, vector<32x128xf32>
    %168 = arith.select %158, %36, %167 : vector<32x128xi1>, vector<32x128xf32>
    %169 = arith.select %156, %139, %168 : vector<32x128xi1>, vector<32x128xf32>
    %cst_48 = arith.constant 5.000000e-01 : f32
    %170 = vector.broadcast %cst_48 : f32 to vector<32x128xf32>
    %171 = arith.cmpf olt, %113, %170 : vector<32x128xf32>
    %cst_49 = arith.constant 1.500000e+00 : f32
    %172 = vector.broadcast %cst_49 : f32 to vector<32x128xf32>
    %173 = arith.cmpf olt, %113, %172 : vector<32x128xf32>
    %cst_50 = arith.constant 2.500000e+00 : f32
    %174 = vector.broadcast %cst_50 : f32 to vector<32x128xf32>
    %175 = arith.cmpf olt, %113, %174 : vector<32x128xf32>
    %cst_51 = arith.constant 3.500000e+00 : f32
    %176 = vector.broadcast %cst_51 : f32 to vector<32x128xf32>
    %177 = arith.cmpf olt, %113, %176 : vector<32x128xf32>
    %cst_52 = arith.constant 4.500000e+00 : f32
    %178 = vector.broadcast %cst_52 : f32 to vector<32x128xf32>
    %179 = arith.cmpf olt, %113, %178 : vector<32x128xf32>
    %180 = arith.select %179, %36, %129 : vector<32x128xi1>, vector<32x128xf32>
    %181 = arith.select %177, %36, %180 : vector<32x128xi1>, vector<32x128xf32>
    %182 = arith.select %175, %139, %181 : vector<32x128xi1>, vector<32x128xf32>
    %183 = arith.select %173, %121, %182 : vector<32x128xi1>, vector<32x128xf32>
    %184 = arith.select %171, %121, %183 : vector<32x128xi1>, vector<32x128xf32>
    %185 = vector.shape_cast %154 : vector<32x128xf32> to vector<1x32x128xf32>
    %186 = vector.shape_cast %169 : vector<32x128xf32> to vector<1x32x128xf32>
    %187 = vector.shape_cast %184 : vector<32x128xf32> to vector<1x32x128xf32>
    %188 = tpu.concatenate %185, %186, %187 in 0 : vector<1x32x128xf32>, vector<1x32x128xf32>, vector<1x32x128xf32> -> vector<3x32x128xf32>
    %189 = vector.extract_strided_slice %188 {offsets = [2, 0, 0], sizes = [1, 32, 128], strides = [1, 1, 1]} : vector<3x32x128xf32> to vector<1x32x128xf32>
    %190 = vector.shape_cast %189 : vector<1x32x128xf32> to vector<32x128xf32>
    %191 = arith.truncf %190 : vector<32x128xf32> to vector<32x128xbf16>
    %c0_53 = arith.constant 0 : index
    %c0_54 = arith.constant 0 : index
    %c0_55 = arith.constant 0 : index
    %192 = vector.load %arg3[%c0_53, %c0_54, %c0_55] : memref<3x32x128xbf16, #tpu.memory_space<vmem>>, vector<1x32x128xbf16>
    %193 = vector.shape_cast %192 : vector<1x32x128xbf16> to vector<32x128xbf16>
    %194 = vector.shape_cast %191 : vector<32x128xbf16> to vector<1x32x128xbf16>
    tpu.vector_store %arg3[%c0_53, %c0_54, %c0_55], %194 {strides = array<i32>} : memref<3x32x128xbf16, #tpu.memory_space<vmem>>, vector<1x32x128xbf16>,
    %195 = vector.extract_strided_slice %188 {offsets = [1, 0, 0], sizes = [1, 32, 128], strides = [1, 1, 1]} : vector<3x32x128xf32> to vector<1x32x128xf32>
    %196 = vector.shape_cast %195 : vector<1x32x128xf32> to vector<32x128xf32>
    %197 = arith.truncf %196 : vector<32x128xf32> to vector<32x128xbf16>
    %c1 = arith.constant 1 : index
    %c0_56 = arith.constant 0 : index
    %c0_57 = arith.constant 0 : index
    %198 = vector.load %arg3[%c1, %c0_56, %c0_57] : memref<3x32x128xbf16, #tpu.memory_space<vmem>>, vector<1x32x128xbf16>
    %199 = vector.shape_cast %198 : vector<1x32x128xbf16> to vector<32x128xbf16>
    %200 = vector.shape_cast %197 : vector<32x128xbf16> to vector<1x32x128xbf16>
    tpu.vector_store %arg3[%c1, %c0_56, %c0_57], %200 {strides = array<i32>} : memref<3x32x128xbf16, #tpu.memory_space<vmem>>, vector<1x32x128xbf16>,
    %201 = vector.extract_strided_slice %188 {offsets = [0, 0, 0], sizes = [1, 32, 128], strides = [1, 1, 1]} : vector<3x32x128xf32> to vector<1x32x128xf32>
    %202 = vector.shape_cast %201 : vector<1x32x128xf32> to vector<32x128xf32>
    %203 = arith.truncf %202 : vector<32x128xf32> to vector<32x128xbf16>
    %c2 = arith.constant 2 : index
    %c0_58 = arith.constant 0 : index
    %c0_59 = arith.constant 0 : index
    %204 = vector.load %arg3[%c2, %c0_58, %c0_59] : memref<3x32x128xbf16, #tpu.memory_space<vmem>>, vector<1x32x128xbf16>
    %205 = vector.shape_cast %204 : vector<1x32x128xbf16> to vector<32x128xbf16>
    %206 = vector.shape_cast %203 : vector<32x128xbf16> to vector<1x32x128xbf16>
    tpu.vector_store %arg3[%c2, %c0_58, %c0_59], %206 {strides = array<i32>} : memref<3x32x128xbf16, #tpu.memory_space<vmem>>, vector<1x32x128xbf16>,
    return
  }
  func.func @transform_0(%arg0: i32) -> (i32, i32) {
    %c0_i32 = arith.constant 0 : i32
    %c0_i32_0 = arith.constant 0 : i32
    %c0_i32_1 = arith.constant 0 : i32
    return %c0_i32, %c0_i32_0 : i32, i32
  }
  func.func @transform_1(%arg0: i32) -> (i32, i32, i32) {
    %c0_i32 = arith.constant 0 : i32
    %c0_i32_0 = arith.constant 0 : i32
    %c0_i32_1 = arith.constant 0 : i32
    return %c0_i32, %arg0, %c0_i32_0 : i32, i32, i32
  }
  func.func @transform_2(%arg0: i32) -> (i32, i32, i32) {
    %c0_i32 = arith.constant 0 : i32
    %c0_i32_0 = arith.constant 0 : i32
    %c0_i32_1 = arith.constant 0 : i32
    return %c0_i32, %arg0, %c0_i32_0 : i32, i32, i32
  }
}

</mosaic_0001>

<llo_original>
// kernel: tpu_custom_call.1
$region0: #{tpu_custom_call.1}
  #allocation0 [shape = 'u32[]', space=smem, size = 0x4, offset = 0x4, fixed_abs, tag = 'smem constant byte address 0x4 - core index']
  #allocation1 [shape = 'u32[144,128]{1,0:T(1,128)}', space=vmem, size = 0x12000, scoped, tag = 'internal scratch']
  #allocation2 [shape = 'f32[1,1]{1,0:T(1,128)S(6)}', space=smem, size = 0x200, scoped, tag = 'scoped memory for tpu_custom_call.1']
  %s0 = inlined_call_operand.<no memory space> [shape: f32[1,1], index: 0, kind: input, shape index: {}]
  %s1 = inlined_call_operand.hbm [shape: u8[3,32,128], index: 1, kind: input, shape index: {}]
  %s2 = inlined_call_operand.hbm [shape: bf16[3,32,128], index: 2, kind: output, shape index: {}]
  %s3 = sld [smem:[#allocation0]]
  $region22: #{tpu_custom_call.1} parent=0
    _
  %s5 = ssub.s32 1, %s3
  %s6 = scalar_select 0, %s5, %s3
  %7 = sst [smem:[#allocation2]] %s0
  $region1: #{tpu_custom_call.1} parent=0
    #allocation3 [shape = 'u8[12288]{0}', space=vmem, size = 0x3000, scoped, tag = 'input window, operand 1, single buffered']
    #allocation4 [shape = 's32[1]{0}', space=sflag, size = 0x4, scoped, tag = 'scoped memory for tpu_custom_call.1']
    #allocation5 [shape = 's32[1]{0}', space=sflag, size = 0x4, scoped, tag = 'scoped memory for tpu_custom_call.1']
    #allocation6 [shape = 'u8[24576]{0}', space=vmem, size = 0x6000, scoped, tag = 'output window, operand 0, single buffered']
    %8 = vsyncpa [#allocation4], 0
    %9 = vsyncpa [#allocation5], 0
    // Predicated region
    $region2: #{tpu_custom_call.1} parent=1 // pred_check
      _
    $region3: #{tpu_custom_call.1} parent=1 // pred_check_branch
      %11 = sbr.rel (0) target = $region5
    $region4: #{tpu_custom_call.1} parent=1 // pred_region
      _
    $region5: #{tpu_custom_call.1} parent=1 // pred_fallthru
      _
    // Predicated region
    $region6: #{tpu_custom_call.1} parent=1 // pred_check
      _
    $region7: #{tpu_custom_call.1} parent=1 // pred_check_branch
      %13 = sbr.rel (0) target = $region9
    $region8: #{tpu_custom_call.1} parent=1 // pred_region
      %s15 = ssub.s32 384, 384
      %16 = vsyncadd [#allocation4], %s15
      %s17 = sshll.u32 [#allocation3], 4
      %s18 = int_to_ptr.vmem [resolvable:$true] %s17
      %23 = dma.hbm_to_vmem [thread:$0]  %s1, 384, %s18, [#allocation4], 128, 128, 8
    $region9: #{tpu_custom_call.1} parent=1 // pred_fallthru
      _
    // Predicated region
    $region10: #{tpu_custom_call.1} parent=1 // pred_check
      _
    $region11: #{tpu_custom_call.1} parent=1 // pred_check_branch
      %25 = sbr.rel (0) target = $region13
    $region12: #{tpu_custom_call.1} parent=1 // pred_region
      %26 = dma.done [#allocation4], 384
    $region13: #{tpu_custom_call.1} parent=1 // pred_fallthru
      _
    %v27 = vld [vmem:[#allocation3] sm:$0xff]
    %v28 = vld [vmem:[#allocation3 + $0x8] sm:$0xff]
    %v29 = vld [vmem:[#allocation3 + $0x10] sm:$0xff]
    %v30 = vunpack.c.0.s8 %v27
    %v31 = vunpack.c.1.s8 %v27
    %v32 = vunpack.c.2.s8 %v27
    %v33 = vunpack.c.3.s8 %v27
    %v34 = vunpack.c.0.s8 %v28
    %v35 = vunpack.c.1.s8 %v28
    %v36 = vunpack.c.2.s8 %v28
    %v37 = vunpack.c.3.s8 %v28
    %v38 = vunpack.c.0.s8 %v29
    %v39 = vunpack.c.1.s8 %v29
    %v40 = vunpack.c.2.s8 %v29
    %v41 = vunpack.c.3.s8 %v29
    %v42 = vand.u32 %v30, 255
    %v43 = vand.u32 %v31, 255
    %v44 = vand.u32 %v32, 255
    %v45 = vand.u32 %v33, 255
    %v46 = vand.u32 %v34, 255
    %v47 = vand.u32 %v35, 255
    %v48 = vand.u32 %v36, 255
    %v49 = vand.u32 %v37, 255
    %v50 = vand.u32 %v38, 255
    %v51 = vand.u32 %v39, 255
    %v52 = vand.u32 %v40, 255
    %v53 = vand.u32 %v41, 255
    %v54 = vcvt.s32.f32 %v42
    %v55 = vcvt.s32.f32 %v43
    %v56 = vcvt.s32.f32 %v44
    %v57 = vcvt.s32.f32 %v45
    %v58 = vcvt.s32.f32 %v46
    %v59 = vcvt.s32.f32 %v47
    %v60 = vcvt.s32.f32 %v48
    %v61 = vcvt.s32.f32 %v49
    %v62 = vcvt.s32.f32 %v50
    %v63 = vcvt.s32.f32 %v51
    %v64 = vcvt.s32.f32 %v52
    %v65 = vcvt.s32.f32 %v53
    %v66 = vmul.f32 %v54, 0.003921569
    %v67 = vmul.f32 %v55, 0.003921569
    %v68 = vmul.f32 %v56, 0.003921569
    %v69 = vmul.f32 %v57, 0.003921569
    %v70 = vmul.f32 %v58, 0.003921569
    %v71 = vmul.f32 %v59, 0.003921569
    %v72 = vmul.f32 %v60, 0.003921569
    %v73 = vmul.f32 %v61, 0.003921569
    %v74 = vmul.f32 %v62, 0.003921569
    %v75 = vmul.f32 %v63, 0.003921569
    %v76 = vmul.f32 %v64, 0.003921569
    %v77 = vmul.f32 %v65, 0.003921569
    %v78 = vmul.f32 %v66, 0.2989
    %v79 = vmul.f32 %v67, 0.2989
    %v80 = vmul.f32 %v68, 0.2989
    %v81 = vmul.f32 %v69, 0.2989
    %v82 = vmul.f32 %v70, 0.587
    %v83 = vmul.f32 %v71, 0.587
    %v84 = vmul.f32 %v72, 0.587
    %v85 = vmul.f32 %v73, 0.587
    %v86 = vadd.f32 %v78, %v82
    %v87 = vadd.f32 %v79, %v83
    %v88 = vadd.f32 %v80, %v84
    %v89 = vadd.f32 %v81, %v85
    %v90 = vmul.f32 %v74, 0.114
    %v91 = vmul.f32 %v75, 0.114
    %v92 = vmul.f32 %v76, 0.114
    %v93 = vmul.f32 %v77, 0.114
    %v94 = vadd.f32 %v86, %v90
    %v95 = vadd.f32 %v87, %v91
    %v96 = vadd.f32 %v88, %v92
    %v97 = vadd.f32 %v89, %v93
    %v98 = vmul.f32 %v66, 1.0210366
    %v99 = vmul.f32 %v67, 1.0210366
    %v100 = vmul.f32 %v68, 1.0210366
    %v101 = vmul.f32 %v69, 1.0210366
    %v102 = vmul.f32 %v70, 1.0210366
    %v103 = vmul.f32 %v71, 1.0210366
    %v104 = vmul.f32 %v72, 1.0210366
    %v105 = vmul.f32 %v73, 1.0210366
    %v106 = vmul.f32 %v74, 1.0210366
    %v107 = vmul.f32 %v75, 1.0210366
    %v108 = vmul.f32 %v76, 1.0210366
    %v109 = vmul.f32 %v77, 1.0210366
    %v110 = vmul.f32 %v94, -0.021036606
    %v111 = vmul.f32 %v95, -0.021036606
    %v112 = vmul.f32 %v96, -0.021036606
    %v113 = vmul.f32 %v97, -0.021036606
    %v114 = vadd.f32 %v98, %v110
    %v115 = vadd.f32 %v99, %v111
    %v116 = vadd.f32 %v100, %v112
    %v117 = vadd.f32 %v101, %v113
    %v118 = vadd.f32 %v102, %v110
    %v119 = vadd.f32 %v103, %v111
    %v120 = vadd.f32 %v104, %v112
    %v121 = vadd.f32 %v105, %v113
    %v122 = vadd.f32 %v106, %v110
    %v123 = vadd.f32 %v107, %v111
    %v124 = vadd.f32 %v108, %v112
    %v125 = vadd.f32 %v109, %v113
    %v126 = vmax.f32 %v114, 0.0
    %v127 = vmax.f32 %v115, 0.0
    %v128 = vmax.f32 %v116, 0.0
    %v129 = vmax.f32 %v117, 0.0
    %v130 = vmax.f32 %v118, 0.0
    %v131 = vmax.f32 %v119, 0.0
    %v132 = vmax.f32 %v120, 0.0
    %v133 = vmax.f32 %v121, 0.0
    %v134 = vmax.f32 %v122, 0.0
    %v135 = vmax.f32 %v123, 0.0
    %v136 = vmax.f32 %v124, 0.0
    %v137 = vmax.f32 %v125, 0.0
    %v138 = vmin.f32 %v126, 1.0
    %v139 = vmin.f32 %v127, 1.0
    %v140 = vmin.f32 %v128, 1.0
    %v141 = vmin.f32 %v129, 1.0
    %v142 = vmin.f32 %v130, 1.0
    %v143 = vmin.f32 %v131, 1.0
    %v144 = vmin.f32 %v132, 1.0
    %v145 = vmin.f32 %v133, 1.0
    %v146 = vmin.f32 %v134, 1.0
    %v147 = vmin.f32 %v135, 1.0
    %v148 = vmin.f32 %v136, 1.0
    %v149 = vmin.f32 %v137, 1.0
    %v150 = vmax.f32 %v138, %v142
    %v151 = vmax.f32 %v139, %v143
    %v152 = vmax.f32 %v140, %v144
    %v153 = vmax.f32 %v141, %v145
    %v154 = vmax.f32 %v150, %v146
    %v155 = vmax.f32 %v151, %v147
    %v156 = vmax.f32 %v152, %v148
    %v157 = vmax.f32 %v153, %v149
    %v158 = vmin.f32 %v138, %v142
    %v159 = vmin.f32 %v139, %v143
    %v160 = vmin.f32 %v140, %v144
    %v161 = vmin.f32 %v141, %v145
    %v162 = vmin.f32 %v158, %v146
    %v163 = vmin.f32 %v159, %v147
    %v164 = vmin.f32 %v160, %v148
    %v165 = vmin.f32 %v161, %v149
    %vm166 = vcmp.eq.f32.partialorder %v154, %v162
    %vm167 = vcmp.eq.f32.partialorder %v155, %v163
    %vm168 = vcmp.eq.f32.partialorder %v156, %v164
    %vm169 = vcmp.eq.f32.partialorder %v157, %v165
    %v170 = vsub.f32 %v154, %v162
    %v171 = vsub.f32 %v155, %v163
    %v172 = vsub.f32 %v156, %v164
    %v173 = vsub.f32 %v157, %v165
    %v174 = vsel %vm166, 1.0, %v154
    %v175 = vsel %vm167, 1.0, %v155
    %v176 = vsel %vm168, 1.0, %v156
    %v177 = vsel %vm169, 1.0, %v157
    %v178 = vrcp.pop %v174
    %v179 = vrcp.pop %v175
    %v180 = vrcp.pop %v176
    %v181 = vrcp.pop %v177
    %v182 = vmul.f32 %v170, %v178
    %v183 = vmul.f32 %v171, %v179
    %v184 = vmul.f32 %v172, %v180
    %v185 = vmul.f32 %v173, %v181
    %v186 = vsel %vm166, 1.0, %v170
    %v187 = vsel %vm167, 1.0, %v171
    %v188 = vsel %vm168, 1.0, %v172
    %v189 = vsel %vm169, 1.0, %v173
    %v190 = vrcp.pop %v186
    %v191 = vrcp.pop %v187
    %v192 = vrcp.pop %v188
    %v193 = vrcp.pop %v189
    %v194 = vsub.f32 %v154, %v138
    %v195 = vsub.f32 %v155, %v139
    %v196 = vsub.f32 %v156, %v140
    %v197 = vsub.f32 %v157, %v141
    %v198 = vmul.f32 %v194, %v190
    %v199 = vmul.f32 %v195, %v191
    %v200 = vmul.f32 %v196, %v192
    %v201 = vmul.f32 %v197, %v193
    %v202 = vsub.f32 %v154, %v142
    %v203 = vsub.f32 %v155, %v143
    %v204 = vsub.f32 %v156, %v144
    %v205 = vsub.f32 %v157, %v145
    %v206 = vmul.f32 %v202, %v190
    %v207 = vmul.f32 %v203, %v191
    %v208 = vmul.f32 %v204, %v192
    %v209 = vmul.f32 %v205, %v193
    %v210 = vsub.f32 %v154, %v146
    %v211 = vsub.f32 %v155, %v147
    %v212 = vsub.f32 %v156, %v148
    %v213 = vsub.f32 %v157, %v149
    %v214 = vmul.f32 %v210, %v190
    %v215 = vmul.f32 %v211, %v191
    %v216 = vmul.f32 %v212, %v192
    %v217 = vmul.f32 %v213, %v193
    %vm218 = vcmp.eq.f32.partialorder %v154, %v138
    %vm219 = vcmp.eq.f32.partialorder %v155, %v139
    %vm220 = vcmp.eq.f32.partialorder %v156, %v140
    %vm221 = vcmp.eq.f32.partialorder %v157, %v141
    %v222 = vsub.f32 %v214, %v206
    %v223 = vsub.f32 %v215, %v207
    %v224 = vsub.f32 %v216, %v208
    %v225 = vsub.f32 %v217, %v209
    %v226 = vsel %vm218, %v222, 0.0
    %v227 = vsel %vm219, %v223, 0.0
    %v228 = vsel %vm220, %v224, 0.0
    %v229 = vsel %vm221, %v225, 0.0
    %vm230 = vcmp.eq.f32.partialorder %v154, %v142
    %vm231 = vcmp.eq.f32.partialorder %v155, %v143
    %vm232 = vcmp.eq.f32.partialorder %v156, %v144
    %vm233 = vcmp.eq.f32.partialorder %v157, %v145
    %vm234 = vcmp.ne.f32.partialorder %v154, %v138
    %vm235 = vcmp.ne.f32.partialorder %v155, %v139
    %vm236 = vcmp.ne.f32.partialorder %v156, %v140
    %vm237 = vcmp.ne.f32.partialorder %v157, %v141
    %vm238 = vmand %vm230, %vm234
    %vm239 = vmand %vm231, %vm235
    %vm240 = vmand %vm232, %vm236
    %vm241 = vmand %vm233, %vm237
    %v242 = vadd.f32 %v198, 2.0
    %v243 = vadd.f32 %v199, 2.0
    %v244 = vadd.f32 %v200, 2.0
    %v245 = vadd.f32 %v201, 2.0
    %v246 = vsub.f32 %v242, %v214
    %v247 = vsub.f32 %v243, %v215
    %v248 = vsub.f32 %v244, %v216
    %v249 = vsub.f32 %v245, %v217
    %v250 = vsel %vm238, %v246, 0.0
    %v251 = vsel %vm239, %v247, 0.0
    %v252 = vsel %vm240, %v248, 0.0
    %v253 = vsel %vm241, %v249, 0.0
    %vm254 = vcmp.ne.f32.partialorder %v154, %v142
    %vm255 = vcmp.ne.f32.partialorder %v155, %v143
    %vm256 = vcmp.ne.f32.partialorder %v156, %v144
    %vm257 = vcmp.ne.f32.partialorder %v157, %v145
    %vm258 = vmand %vm254, %vm234
    %vm259 = vmand %vm255, %vm235
    %vm260 = vmand %vm256, %vm236
    %vm261 = vmand %vm257, %vm237
    %v262 = vadd.f32 %v206, 4.0
    %v263 = vadd.f32 %v207, 4.0
    %v264 = vadd.f32 %v208, 4.0
    %v265 = vadd.f32 %v209, 4.0
    %v266 = vsub.f32 %v262, %v198
    %v267 = vsub.f32 %v263, %v199
    %v268 = vsub.f32 %v264, %v200
    %v269 = vsub.f32 %v265, %v201
    %v270 = vsel %vm258, %v266, 0.0
    %v271 = vsel %vm259, %v267, 0.0
    %v272 = vsel %vm260, %v268, 0.0
    %v273 = vsel %vm261, %v269, 0.0
    %v274 = vadd.f32 %v226, %v250
    %v275 = vadd.f32 %v227, %v251
    %v276 = vadd.f32 %v228, %v252
    %v277 = vadd.f32 %v229, %v253
    %v278 = vadd.f32 %v274, %v270
    %v279 = vadd.f32 %v275, %v271
    %v280 = vadd.f32 %v276, %v272
    %v281 = vadd.f32 %v277, %v273
    %v282 = vmul.f32 %v278, 0.16666667
    %v283 = vmul.f32 %v279, 0.16666667
    %v284 = vmul.f32 %v280, 0.16666667
    %v285 = vmul.f32 %v281, 0.16666667
    %v286 = vadd.f32 %v282, 1.0
    %v287 = vadd.f32 %v283, 1.0
    %v288 = vadd.f32 %v284, 1.0
    %v289 = vadd.f32 %v285, 1.0
    %v290 = vand.u32 2147483647, %v286
    %v291 = vrcp.pop 1.0
    %v292 = vmul.f32 %v290, %v291
    %v293 = vfloor.f32 %v292
    %v294 = vsub.f32 %v290, %v293
    %vm295 = vcmp.eq.f32.partialorder %v294, 1.0
    %v296 = vsel %vm295, 0.0, %v294
    %v297 = vand.u32 2147483647, %v296
    %v298 = vand.u32 %v286, 2147483648
    %v299 = vor.u32 %v297, %v298
    %v300 = vand.u32 2147483647, %v287
    %v301 = vrcp.pop 1.0
    %v302 = vmul.f32 %v300, %v301
    %v303 = vfloor.f32 %v302
    %v304 = vsub.f32 %v300, %v303
    %vm305 = vcmp.eq.f32.partialorder %v304, 1.0
    %v306 = vsel %vm305, 0.0, %v304
    %v307 = vand.u32 2147483647, %v306
    %v308 = vand.u32 %v287, 2147483648
    %v309 = vor.u32 %v307, %v308
    %v310 = vand.u32 2147483647, %v288
    %v311 = vrcp.pop 1.0
    %v312 = vmul.f32 %v310, %v311
    %v313 = vfloor.f32 %v312
    %v314 = vsub.f32 %v310, %v313
    %vm315 = vcmp.eq.f32.partialorder %v314, 1.0
    %v316 = vsel %vm315, 0.0, %v314
    %v317 = vand.u32 2147483647, %v316
    %v318 = vand.u32 %v288, 2147483648
    %v319 = vor.u32 %v317, %v318
    %v320 = vand.u32 2147483647, %v289
    %v321 = vrcp.pop 1.0
    %v322 = vmul.f32 %v320, %v321
    %v323 = vfloor.f32 %v322
    %v324 = vsub.f32 %v320, %v323
    %vm325 = vcmp.eq.f32.partialorder %v324, 1.0
    %v326 = vsel %vm325, 0.0, %v324
    %v327 = vand.u32 2147483647, %v326
    %v328 = vand.u32 %v289, 2147483648
    %v329 = vor.u32 %v327, %v328
    %vm330 = vcmp.ne.f32.partialorder %v299, 0.0
    %vm331 = vcmp.ne.f32.partialorder %v309, 0.0
    %vm332 = vcmp.ne.f32.partialorder %v319, 0.0
    %vm333 = vcmp.ne.f32.partialorder %v329, 0.0
    %vm334 = vcmp.lt.f32.partialorder %v299, 0.0
    %vm335 = vcmp.lt.f32.partialorder %v309, 0.0
    %vm336 = vcmp.lt.f32.partialorder %v319, 0.0
    %vm337 = vcmp.lt.f32.partialorder %v329, 0.0
    %vm338 = vmand %vm334, %vm330
    %vm339 = vmand %vm335, %vm331
    %vm340 = vmand %vm336, %vm332
    %vm341 = vmand %vm337, %vm333
    %v342 = vadd.f32 %v299, 1.0
    %v343 = vadd.f32 %v309, 1.0
    %v344 = vadd.f32 %v319, 1.0
    %v345 = vadd.f32 %v329, 1.0
    %v346 = vsel %vm338, %v342, %v299
    %v347 = vsel %vm339, %v343, %v309
    %v348 = vsel %vm340, %v344, %v319
    %v349 = vsel %vm341, %v345, %v329
    %v350 = vadd.f32 %v346, -0.044566203
    %v351 = vadd.f32 %v347, -0.044566203
    %v352 = vadd.f32 %v348, -0.044566203
    %v353 = vadd.f32 %v349, -0.044566203
    %v354 = vand.u32 2147483647, %v350
    %v355 = vrcp.pop 1.0
    %v356 = vmul.f32 %v354, %v355
    %v357 = vfloor.f32 %v356
    %v358 = vsub.f32 %v354, %v357
    %vm359 = vcmp.eq.f32.partialorder %v358, 1.0
    %v360 = vsel %vm359, 0.0, %v358
    %v361 = vand.u32 2147483647, %v360
    %v362 = vand.u32 %v350, 2147483648
    %v363 = vor.u32 %v361, %v362
    %v364 = vand.u32 2147483647, %v351
    %v365 = vrcp.pop 1.0
    %v366 = vmul.f32 %v364, %v365
    %v367 = vfloor.f32 %v366
    %v368 = vsub.f32 %v364, %v367
    %vm369 = vcmp.eq.f32.partialorder %v368, 1.0
    %v370 = vsel %vm369, 0.0, %v368
    %v371 = vand.u32 2147483647, %v370
    %v372 = vand.u32 %v351, 2147483648
    %v373 = vor.u32 %v371, %v372
    %v374 = vand.u32 2147483647, %v352
    %v375 = vrcp.pop 1.0
    %v376 = vmul.f32 %v374, %v375
    %v377 = vfloor.f32 %v376
    %v378 = vsub.f32 %v374, %v377
    %vm379 = vcmp.eq.f32.partialorder %v378, 1.0
    %v380 = vsel %vm379, 0.0, %v378
    %v381 = vand.u32 2147483647, %v380
    %v382 = vand.u32 %v352, 2147483648
    %v383 = vor.u32 %v381, %v382
    %v384 = vand.u32 2147483647, %v353
    %v385 = vrcp.pop 1.0
    %v386 = vmul.f32 %v384, %v385
    %v387 = vfloor.f32 %v386
    %v388 = vsub.f32 %v384, %v387
    %vm389 = vcmp.eq.f32.partialorder %v388, 1.0
    %v390 = vsel %vm389, 0.0, %v388
    %v391 = vand.u32 2147483647, %v390
    %v392 = vand.u32 %v353, 2147483648
    %v393 = vor.u32 %v391, %v392
    %vm394 = vcmp.ne.f32.partialorder %v363, 0.0
    %vm395 = vcmp.ne.f32.partialorder %v373, 0.0
    %vm396 = vcmp.ne.f32.partialorder %v383, 0.0
    %vm397 = vcmp.ne.f32.partialorder %v393, 0.0
    %vm398 = vcmp.lt.f32.partialorder %v363, 0.0
    %vm399 = vcmp.lt.f32.partialorder %v373, 0.0
    %vm400 = vcmp.lt.f32.partialorder %v383, 0.0
    %vm401 = vcmp.lt.f32.partialorder %v393, 0.0
    %vm402 = vmand %vm398, %vm394
    %vm403 = vmand %vm399, %vm395
    %vm404 = vmand %vm400, %vm396
    %vm405 = vmand %vm401, %vm397
    %v406 = vadd.f32 %v363, 1.0
    %v407 = vadd.f32 %v373, 1.0
    %v408 = vadd.f32 %v383, 1.0
    %v409 = vadd.f32 %v393, 1.0
    %v410 = vsel %vm402, %v406, %v363
    %v411 = vsel %vm403, %v407, %v373
    %v412 = vsel %vm404, %v408, %v383
    %v413 = vsel %vm405, %v409, %v393
    %v414 = vmul.f32 %v410, 6.0
    %v415 = vmul.f32 %v411, 6.0
    %v416 = vmul.f32 %v412, 6.0
    %v417 = vmul.f32 %v413, 6.0
    %v418 = vfloor.f32 %v414
    %v419 = vfloor.f32 %v415
    %v420 = vfloor.f32 %v416
    %v421 = vfloor.f32 %v417
    %v422 = vmin.f32 %v418, 5.0
    %v423 = vmin.f32 %v419, 5.0
    %v424 = vmin.f32 %v420, 5.0
    %v425 = vmin.f32 %v421, 5.0
    %v426 = vsub.f32 %v414, %v422
    %v427 = vsub.f32 %v415, %v423
    %v428 = vsub.f32 %v416, %v424
    %v429 = vsub.f32 %v417, %v425
    %v430 = vsub.f32 1.0, %v182
    %v431 = vsub.f32 1.0, %v183
    %v432 = vsub.f32 1.0, %v184
    %v433 = vsub.f32 1.0, %v185
    %v434 = vmul.f32 %v154, %v430
    %v435 = vmul.f32 %v155, %v431
    %v436 = vmul.f32 %v156, %v432
    %v437 = vmul.f32 %v157, %v433
    %v438 = vmax.f32 %v434, 0.0
    %v439 = vmax.f32 %v435, 0.0
    %v440 = vmax.f32 %v436, 0.0
    %v441 = vmax.f32 %v437, 0.0
    %v442 = vmin.f32 %v438, 1.0
    %v443 = vmin.f32 %v439, 1.0
    %v444 = vmin.f32 %v440, 1.0
    %v445 = vmin.f32 %v441, 1.0
    %v446 = vmul.f32 %v182, %v426
    %v447 = vmul.f32 %v183, %v427
    %v448 = vmul.f32 %v184, %v428
    %v449 = vmul.f32 %v185, %v429
    %v450 = vsub.f32 1.0, %v446
    %v451 = vsub.f32 1.0, %v447
    %v452 = vsub.f32 1.0, %v448
    %v453 = vsub.f32 1.0, %v449
    %v454 = vmul.f32 %v154, %v450
    %v455 = vmul.f32 %v155, %v451
    %v456 = vmul.f32 %v156, %v452
    %v457 = vmul.f32 %v157, %v453
    %v458 = vmax.f32 %v454, 0.0
    %v459 = vmax.f32 %v455, 0.0
    %v460 = vmax.f32 %v456, 0.0
    %v461 = vmax.f32 %v457, 0.0
    %v462 = vmin.f32 %v458, 1.0
    %v463 = vmin.f32 %v459, 1.0
    %v464 = vmin.f32 %v460, 1.0
    %v465 = vmin.f32 %v461, 1.0
    %v466 = vsub.f32 1.0, %v426
    %v467 = vsub.f32 1.0, %v427
    %v468 = vsub.f32 1.0, %v428
    %v469 = vsub.f32 1.0, %v429
    %v470 = vmul.f32 %v182, %v466
    %v471 = vmul.f32 %v183, %v467
    %v472 = vmul.f32 %v184, %v468
    %v473 = vmul.f32 %v185, %v469
    %v474 = vsub.f32 1.0, %v470
    %v475 = vsub.f32 1.0, %v471
    %v476 = vsub.f32 1.0, %v472
    %v477 = vsub.f32 1.0, %v473
    %v478 = vmul.f32 %v154, %v474
    %v479 = vmul.f32 %v155, %v475
    %v480 = vmul.f32 %v156, %v476
    %v481 = vmul.f32 %v157, %v477
    %v482 = vmax.f32 %v478, 0.0
    %v483 = vmax.f32 %v479, 0.0
    %v484 = vmax.f32 %v480, 0.0
    %v485 = vmax.f32 %v481, 0.0
    %v486 = vmin.f32 %v482, 1.0
    %v487 = vmin.f32 %v483, 1.0
    %v488 = vmin.f32 %v484, 1.0
    %v489 = vmin.f32 %v485, 1.0
    %vm490 = vcmp.lt.f32.partialorder %v422, 0.5
    %vm491 = vcmp.lt.f32.partialorder %v423, 0.5
    %vm492 = vcmp.lt.f32.partialorder %v424, 0.5
    %vm493 = vcmp.lt.f32.partialorder %v425, 0.5
    %vm494 = vcmp.lt.f32.partialorder %v422, 1.5
    %vm495 = vcmp.lt.f32.partialorder %v423, 1.5
    %vm496 = vcmp.lt.f32.partialorder %v424, 1.5
    %vm497 = vcmp.lt.f32.partialorder %v425, 1.5
    %vm498 = vcmp.lt.f32.partialorder %v422, 2.5
    %vm499 = vcmp.lt.f32.partialorder %v423, 2.5
    %vm500 = vcmp.lt.f32.partialorder %v424, 2.5
    %vm501 = vcmp.lt.f32.partialorder %v425, 2.5
    %vm502 = vcmp.lt.f32.partialorder %v422, 3.5
    %vm503 = vcmp.lt.f32.partialorder %v423, 3.5
    %vm504 = vcmp.lt.f32.partialorder %v424, 3.5
    %vm505 = vcmp.lt.f32.partialorder %v425, 3.5
    %vm506 = vcmp.lt.f32.partialorder %v422, 4.5
    %vm507 = vcmp.lt.f32.partialorder %v423, 4.5
    %vm508 = vcmp.lt.f32.partialorder %v424, 4.5
    %vm509 = vcmp.lt.f32.partialorder %v425, 4.5
    %v510 = vsel %vm506, %v486, %v154
    %v511 = vsel %vm507, %v487, %v155
    %v512 = vsel %vm508, %v488, %v156
    %v513 = vsel %vm509, %v489, %v157
    %v514 = vsel %vm502, %v442, %v510
    %v515 = vsel %vm503, %v443, %v511
    %v516 = vsel %vm504, %v444, %v512
    %v517 = vsel %vm505, %v445, %v513
    %v518 = vsel %vm498, %v442, %v514
    %v519 = vsel %vm499, %v443, %v515
    %v520 = vsel %vm500, %v444, %v516
    %v521 = vsel %vm501, %v445, %v517
    %v522 = vsel %vm494, %v462, %v518
    %v523 = vsel %vm495, %v463, %v519
    %v524 = vsel %vm496, %v464, %v520
    %v525 = vsel %vm497, %v465, %v521
    %v526 = vsel %vm490, %v154, %v522
    %v527 = vsel %vm491, %v155, %v523
    %v528 = vsel %vm492, %v156, %v524
    %v529 = vsel %vm493, %v157, %v525
    %v530 = vsel %vm502, %v462, %v442
    %v531 = vsel %vm503, %v463, %v443
    %v532 = vsel %vm504, %v464, %v444
    %v533 = vsel %vm505, %v465, %v445
    %v534 = vsel %vm498, %v154, %v530
    %v535 = vsel %vm499, %v155, %v531
    %v536 = vsel %vm500, %v156, %v532
    %v537 = vsel %vm501, %v157, %v533
    %v538 = vsel %vm494, %v154, %v534
    %v539 = vsel %vm495, %v155, %v535
    %v540 = vsel %vm496, %v156, %v536
    %v541 = vsel %vm497, %v157, %v537
    %v542 = vsel %vm490, %v486, %v538
    %v543 = vsel %vm491, %v487, %v539
    %v544 = vsel %vm492, %v488, %v540
    %v545 = vsel %vm493, %v489, %v541
    %v546 = vsel %vm506, %v154, %v462
    %v547 = vsel %vm507, %v155, %v463
    %v548 = vsel %vm508, %v156, %v464
    %v549 = vsel %vm509, %v157, %v465
    %v550 = vsel %vm502, %v154, %v546
    %v551 = vsel %vm503, %v155, %v547
    %v552 = vsel %vm504, %v156, %v548
    %v553 = vsel %vm505, %v157, %v549
    %v554 = vsel %vm498, %v486, %v550
    %v555 = vsel %vm499, %v487, %v551
    %v556 = vsel %vm500, %v488, %v552
    %v557 = vsel %vm501, %v489, %v553
    %v558 = vsel %vm494, %v442, %v554
    %v559 = vsel %vm495, %v443, %v555
    %v560 = vsel %vm496, %v444, %v556
    %v561 = vsel %vm497, %v445, %v557
    %v562 = vsel %vm490, %v442, %v558
    %v563 = vsel %vm491, %v443, %v559
    %v564 = vsel %vm492, %v444, %v560
    %v565 = vsel %vm493, %v445, %v561
    %v566 = vpack.c.bf16 %v563, %v562
    %v567 = vpack.c.bf16 %v565, %v564
    %v570 = vunpack.c.l.b16 %v566
    %v571 = vunpack.c.h.b16 %v566
    %v572 = vunpack.c.l.b16 %v567
    %v573 = vunpack.c.h.b16 %v567
    %v574 = vpack.c.b16 %v570, %v570
    %v575 = vpack.c.b16 %v571, %v571
    %v576 = vpack.c.b16 %v572, %v572
    %v577 = vpack.c.b16 %v573, %v573
    %582 = vst [vmem:[#allocation6] sm:$0xf] %v574
    %583 = vst [vmem:[#allocation6 + $0x4] sm:$0xf] %v575
    %584 = vst [vmem:[#allocation6 + $0x8] sm:$0xf] %v576
    %585 = vst [vmem:[#allocation6 + $0xc] sm:$0xf] %v577
    %v586 = vpack.c.bf16 %v543, %v542
    %v587 = vpack.c.bf16 %v545, %v544
    %v590 = vunpack.c.l.b16 %v586
    %v591 = vunpack.c.h.b16 %v586
    %v592 = vunpack.c.l.b16 %v587
    %v593 = vunpack.c.h.b16 %v587
    %v594 = vpack.c.b16 %v590, %v590
    %v595 = vpack.c.b16 %v591, %v591
    %v596 = vpack.c.b16 %v592, %v592
    %v597 = vpack.c.b16 %v593, %v593
    %s602 = scalar_lea.vmem [#allocation6], 16
    %603 = vst [vmem:[%s602] sm:$0xf] %v594
    %604 = vst [vmem:[%s602 + $0x4] sm:$0xf] %v595
    %605 = vst [vmem:[%s602 + $0x8] sm:$0xf] %v596
    %606 = vst [vmem:[%s602 + $0xc] sm:$0xf] %v597
    %v607 = vpack.c.bf16 %v527, %v526
    %v608 = vpack.c.bf16 %v529, %v528
    %v611 = vunpack.c.l.b16 %v607
    %v612 = vunpack.c.h.b16 %v607
    %v613 = vunpack.c.l.b16 %v608
    %v614 = vunpack.c.h.b16 %v608
    %v615 = vpack.c.b16 %v611, %v611
    %v616 = vpack.c.b16 %v612, %v612
    %v617 = vpack.c.b16 %v613, %v613
    %v618 = vpack.c.b16 %v614, %v614
    %s623 = scalar_lea.vmem [#allocation6], 32
    %624 = vst [vmem:[%s623] sm:$0xf] %v615
    %625 = vst [vmem:[%s623 + $0x4] sm:$0xf] %v616
    %626 = vst [vmem:[%s623 + $0x8] sm:$0xf] %v617
    %627 = vst [vmem:[%s623 + $0xc] sm:$0xf] %v618
    // Predicated region
    $region14: #{tpu_custom_call.1} parent=1 // pred_check
      _
    $region15: #{tpu_custom_call.1} parent=1 // pred_check_branch
      %629 = sbr.rel (0) target = $region17
    $region16: #{tpu_custom_call.1} parent=1 // pred_region
      %s631 = ssub.s32 768, 768
      %632 = vsyncadd [#allocation5], %s631
      %s633 = sshll.u32 [#allocation6], 4
      %s634 = int_to_ptr.vmem [resolvable:$true] %s633
      %639 = dma.vmem_to_hbm [thread:$0]  %s634, 768, %s2, [#allocation5], 64, 64, 4
    $region17: #{tpu_custom_call.1} parent=1 // pred_fallthru
      _
    // Predicated region
    $region18: #{tpu_custom_call.1} parent=1 // pred_check
      _
    $region19: #{tpu_custom_call.1} parent=1 // pred_check_branch
      %641 = sbr.rel (0) target = $region21
    $region20: #{tpu_custom_call.1} parent=1 // pred_region
      %642 = dma.done [#allocation5], 768
    $region21: #{tpu_custom_call.1} parent=1 // pred_fallthru
      _
    %643 = vsyncpa [#allocation4], 1
    %644 = vsyncpa [#allocation5], 1

</llo_original>
